<compile_context>
chip_gen: v6e
topology: v6e:2x2x1
jax: 0.10.0
libtpu: 0.0.40
codegen_flags: <defaults>
</compile_context>

<pallas_src>
import jax
import jax.numpy as jnp
from jax.experimental import pallas as pl
from jax.experimental.pallas import tpu as pltpu


# ---------------------------------------------------------------------------
# small layout helpers
# ---------------------------------------------------------------------------
def _round_up(x, m):
    return ((x + m - 1) // m) * m


def _choose_lane_tile(s, max_lanes=2048):
    """s is a multiple of 128; return the largest multiple-of-128 divisor of s <= max_lanes."""
    k = s // 128
    best = 1
    d = 1
    while d * d <= k:
        if k % d == 0:
            for cand in (d, k // d):
                if cand * 128 <= max_lanes and cand > best:
                    best = cand
        d += 1
    return best * 128


def _pad_lanes(x, target):
    cur = x.shape[-1]
    if cur == target:
        return x
    pad = [(0, 0)] * (x.ndim - 1) + [(0, target - cur)]
    return jnp.pad(x, pad)


# ---------------------------------------------------------------------------
# Pallas kernels
# ---------------------------------------------------------------------------
def _spectral_fma_kernel(vr_ref, vi_ref, wr_ref, wi_ref, br_ref, bi_ref,
                         or_ref, oi_ref):
    # Elementwise complex multiply-add over a lane tile of the full spectrum:
    #   out = vhat * W_full + B_full
    # W_full / B_full are zero outside the 4 retained Fourier corners, so the non-corner
    # modes come out exactly zero (same as the torch scatter into a zeros() buffer).
    vr = vr_ref[...]
    vi = vi_ref[...]
    wr = wr_ref[...]      # (1, LANE) -> broadcast over the batch rows
    wi = wi_ref[...]
    or_ref[...] = vr * wr - vi * wi + br_ref[...]
    oi_ref[...] = vr * wi + vi * wr + bi_ref[...]


def _residual_add_kernel(tail_ref, res_ref, out_ref):
    # out = v[..., -out_steps:] + v_res[..., -1:]
    # tail block: (1, out_steps, LANE); res block: (1, 1, LANE) broadcast over out_steps.
    out_ref[...] = tail_ref[...] + res_ref[...]


# ---------------------------------------------------------------------------
# Pallas-backed building blocks
# ---------------------------------------------------------------------------
def spectral_conv_pallas(v_hat, weight, bias, modes_x, modes_y, modes_t, delta):
    """v_hat: complex64 (b, 1, nx, ny, kt); weight/bias: float32 (4, mx, my, mt, 2)."""
    b, c, nx, ny, kt = v_hat.shape
    assert c == 1
    mx, my, mt = modes_x, modes_y, modes_t
    assert 2 * mx <= nx and 2 * my <= ny, "corner slices must not overlap"
    assert mt <= kt
    sx = [slice(0, mx), slice(nx - mx, nx)]
    sy = [slice(0, my), slice(ny - my, ny)]

    # Pre-scatter the (tiny) per-corner weights and delta-scaled bias into full-spectrum
    # (nx, ny, kt) layouts that are zero outside the corners.  Corner k = ix + 2*iy matches
    # the torch loop ordering.  These are weight-sized ops (no batch dim).
    wr_f = jnp.zeros((nx, ny, kt), jnp.float32)
    wi_f = jnp.zeros((nx, ny, kt), jnp.float32)
    br_f = jnp.zeros((nx, ny, kt), jnp.float32)
    bi_f = jnp.zeros((nx, ny, kt), jnp.float32)
    for k in range(4):
        cx, cy = sx[k % 2], sy[k // 2]
        wr_f = wr_f.at[cx, cy, 0:mt].set(weight[k, ..., 0])
        wi_f = wi_f.at[cx, cy, 0:mt].set(weight[k, ..., 1])
        br_f = br_f.at[cx, cy, 0:mt].set(delta * bias[k, ..., 0])
        bi_f = bi_f.at[cx, cy, 0:mt].set(delta * bias[k, ..., 1])

    # Flatten to lane-dense 2-D views: rows = batch, lanes = nx*ny*kt (padded to 128-mult).
    S = nx * ny * kt
    S128 = _round_up(S, 128)
    vr = _pad_lanes(jnp.real(v_hat).reshape(b, S).astype(jnp.float32), S128)
    vi = _pad_lanes(jnp.imag(v_hat).reshape(b, S).astype(jnp.float32), S128)
    wr = _pad_lanes(wr_f.reshape(1, S), S128)
    wi = _pad_lanes(wi_f.reshape(1, S), S128)
    br = _pad_lanes(br_f.reshape(1, S), S128)
    bi = _pad_lanes(bi_f.reshape(1, S), S128)

    lane = _choose_lane_tile(S128, max_lanes=2048)
    grid = (S128 // lane,)

    v_spec = pl.BlockSpec((b, lane), lambda j: (0, j))
    w_spec = pl.BlockSpec((1, lane), lambda j: (0, j))   # broadcast operands: re-used per tile

    out_r, out_i = pl.pallas_call(
        _spectral_fma_kernel,
        out_shape=(jax.ShapeDtypeStruct((b, S128), jnp.float32),
                   jax.ShapeDtypeStruct((b, S128), jnp.float32)),
        grid=grid,
        in_specs=[v_spec, v_spec, w_spec, w_spec, w_spec, w_spec],
        out_specs=(pl.BlockSpec((b, lane), lambda j: (0, j)),
                   pl.BlockSpec((b, lane), lambda j: (0, j))),
        compiler_params=pltpu.CompilerParams(dimension_semantics=("parallel",)),
    )(vr, vi, wr, wi, br, bi)

    out_r = out_r[:, :S]
    out_i = out_i[:, :S]
    # Reassemble complex for the XLA irfftn (Pallas has no complex dtype).
    out_hat = (out_r + 1j * out_i).astype(v_hat.dtype).reshape(b, 1, nx, ny, kt)
    return out_hat


def residual_add_pallas(tail, res_last):
    """tail: (b, nx, ny, out_steps); res_last: (b, nx, ny, 1) -> (b, nx, ny, out_steps)."""
    b, nx, ny, ts = tail.shape
    sp = nx * ny
    sp128 = _round_up(sp, 128)

    # Lane-dense layout: last dim is the spatial grid (a multiple of 128 for typical grids),
    # out_steps lives on the sublane axis; the residual is broadcast across out_steps via
    # its (1, 1, LANE) block.
    tail_t = _pad_lanes(jnp.moveaxis(tail, -1, 1).reshape(b, ts, sp), sp128)
    res_t = _pad_lanes(res_last.reshape(b, 1, sp), sp128)

    lane = _choose_lane_tile(sp128, max_lanes=2048)
    grid = (b, sp128 // lane)

    out = pl.pallas_call(
        _residual_add_kernel,
        out_shape=jax.ShapeDtypeStruct((b, ts, sp128), tail.dtype),
        grid=grid,
        in_specs=[pl.BlockSpec((1, ts, lane), lambda i, j: (i, 0, j)),
                  pl.BlockSpec((1, 1, lane), lambda i, j: (i, 0, j))],
        out_specs=pl.BlockSpec((1, ts, lane), lambda i, j: (i, 0, j)),
        compiler_params=pltpu.CompilerParams(
            dimension_semantics=("parallel", "parallel")),
    )(tail_t, res_t)

    out = out[:, :, :sp].reshape(b, ts, nx, ny)
    return jnp.moveaxis(out, 1, -1)


# ---------------------------------------------------------------------------
# OutConv forward (out_dim=1, spatial_padding=0, temporal_padding=True, norm='backward')
# ---------------------------------------------------------------------------
def out_conv_forward(v, v_res, out_steps, weight, bias, *, modes, delta,
                     norm="backward"):
    """v: (b, 1, nx, ny, t_latent) f32;  v_res: (b, nx, ny, t_in) f32 -> (b, nx, ny, out_steps)."""
    mx, my, mt = modes
    b, d, nx, ny, _ = v.shape
    assert d == 1, "only the default out_dim == 1 path is implemented"

    v_res_r = v_res[:, None, :, :, :]                       # repeat 'b x y t -> b d x y t'
    v = jnp.concatenate([v_res_r[..., -1:], v], axis=-1)    # (b,1,nx,ny,T)

    # --- SpectralConvT.forward(v, out_steps=out_steps+1), temporal_padding=True ---
    T = v.shape[-1]
    t_pad = T
    vp = jnp.pad(v, ((0, 0), (0, 0), (0, 0), (0, 0), (t_pad, 0)))     # left-pad time
    ntp = vp.shape[-1]
    assert ntp // 2 + 1 >= mt

    v_hat = jnp.fft.rfftn(vp, axes=(-3, -2, -1), norm=norm)           # (b,1,nx,ny,ntp//2+1)
    out_hat = spectral_conv_pallas(v_hat, weight, bias, mx, my, mt, delta)
    os_conv = out_steps + 1
    w = jnp.fft.irfftn(out_hat, s=(nx, ny, os_conv + t_pad),
                       axes=(-3, -2, -1), norm=norm)
    w = w[..., -os_conv:]                                   # (b,1,nx,ny,out_steps+1)

    # --- residual add + squeeze(1) ---
    tail = w[:, 0, :, :, -out_steps:].astype(jnp.float32)   # (b,nx,ny,out_steps)
    res_last = v_res[..., -1:]                              # (b,nx,ny,1)
    return residual_add_pallas(tail, res_last)


# Pure-JAX reference (no Pallas) for numerical verification.
def out_conv_forward_ref(v, v_res, out_steps, weight, bias, *, modes, delta,
                         norm="backward"):
    mx, my, mt = modes
    b, d, nx, ny, _ = v.shape
    v_res_r = v_res[:, None, :, :, :]
    v = jnp.concatenate([v_res_r[..., -1:], v], axis=-1)
    T = v.shape[-1]
    t_pad = T
    vp = jnp.pad(v, ((0, 0), (0, 0), (0, 0), (0, 0), (t_pad, 0)))
    v_hat = jnp.fft.rfftn(vp, axes=(-3, -2, -1), norm=norm)
    wc = (weight[..., 0] + 1j * weight[..., 1]).astype(v_hat.dtype)
    bc = (bias[..., 0] + 1j * bias[..., 1]).astype(v_hat.dtype)
    sx = [slice(0, mx), slice(nx - mx, nx)]
    sy = [slice(0, my), slice(ny - my, ny)]
    out_hat = jnp.zeros_like(v_hat)
    for k in range(4):
        blk = v_hat[:, :, sx[k % 2], sy[k // 2], 0:mt] * wc[k][None, None] \
              + delta * bc[k][None, None]
        out_hat = out_hat.at[:, :, sx[k % 2], sy[k // 2], 0:mt].set(blk)
    os_conv = out_steps + 1
    w = jnp.fft.irfftn(out_hat, s=(nx, ny, os_conv + t_pad), axes=(-3, -2, -1), norm=norm)
    w = w[..., -os_conv:]
    out = v_res_r[..., -1:] + w[..., -out_steps:]
    return out[:, 0]


if __name__ == "__main__":
    # Small, OutConv-consistent shapes.
    b, out_dim, nx, ny = 2, 1, 16, 16
    t_latent, t_in, out_steps = 7, 6, 6
    modes = (6, 6, 4)          # (modes_x, modes_y, modes_t)
    delta = 0.1
    mx, my, mt = modes

    key = jax.random.PRNGKey(0)
    kw, kb, kv, kr = jax.random.split(key, 4)
    # SpectralConv weights: 4 corners, (in=1, out=1) channel dims squeezed -> (4,mx,my,mt,2),
    # scale = 1/(in_channels*out_channels) = 1.  Bias: (4,mx,my,mt,2).  Deterministic init.
    weight = jax.random.uniform(kw, (4, mx, my, mt, 2), jnp.float32, minval=-1.0, maxval=1.0)
    bias = 0.1 * jax.random.normal(kb, (4, mx, my, mt, 2), jnp.float32)

    v = jax.random.normal(kv, (b, out_dim, nx, ny, t_latent), jnp.float32)
    v_res = jax.random.normal(kr, (b, nx, ny, t_in), jnp.float32)

    out = out_conv_forward(v, v_res, out_steps, weight, bias, modes=modes, delta=delta)
    out = jax.block_until_ready(out)

    ref = out_conv_forward_ref(v, v_res, out_steps, weight, bias, modes=modes, delta=delta)
    assert out.shape == (b, nx, ny, out_steps), out.shape
    assert jnp.allclose(out, ref, rtol=1e-4, atol=1e-4), "mismatch vs pure-JAX reference"
    print("KERNEL_OK")
</pallas_src>

<mosaic_0001>
module attributes {stable_mosaic.version = 11 : i64} {
  func.func @_spectral_fma_kernel(%arg0: i32, %arg1: memref<2x1152xf32, #tpu.memory_space<vmem>>, %arg2: memref<2x1152xf32, #tpu.memory_space<vmem>>, %arg3: memref<1x1152xf32, #tpu.memory_space<vmem>>, %arg4: memref<1x1152xf32, #tpu.memory_space<vmem>>, %arg5: memref<1x1152xf32, #tpu.memory_space<vmem>>, %arg6: memref<1x1152xf32, #tpu.memory_space<vmem>>, %arg7: memref<2x1152xf32, #tpu.memory_space<vmem>>, %arg8: memref<2x1152xf32, #tpu.memory_space<vmem>>) attributes {dimension_semantics = [#tpu.dimension_semantics<parallel>], iteration_bounds = array<i64: 2>, scalar_prefetch = 0 : i64, scratch_operands = 0 : i64, tpu.core_type = #tpu.core_type<tc>, window_params = [{transform_indices = @transform_0, window_bounds = array<i64: 2, 1152>}, {transform_indices = @transform_1, window_bounds = array<i64: 2, 1152>}, {transform_indices = @transform_2, window_bounds = array<i64: 1, 1152>}, {transform_indices = @transform_3, window_bounds = array<i64: 1, 1152>}, {transform_indices = @transform_4, window_bounds = array<i64: 1, 1152>}, {transform_indices = @transform_5, window_bounds = array<i64: 1, 1152>}, {transform_indices = @transform_6, window_bounds = array<i64: 2, 1152>}, {transform_indices = @transform_7, window_bounds = array<i64: 2, 1152>}]} {
    %c0 = arith.constant 0 : index
    %c0_0 = arith.constant 0 : index
    %0 = vector.load %arg1[%c0, %c0_0] : memref<2x1152xf32, #tpu.memory_space<vmem>>, vector<2x1152xf32>
    %c0_1 = arith.constant 0 : index
    %c0_2 = arith.constant 0 : index
    %1 = vector.load %arg2[%c0_1, %c0_2] : memref<2x1152xf32, #tpu.memory_space<vmem>>, vector<2x1152xf32>
    %c0_3 = arith.constant 0 : index
    %c0_4 = arith.constant 0 : index
    %2 = vector.load %arg3[%c0_3, %c0_4] : memref<1x1152xf32, #tpu.memory_space<vmem>>, vector<1x1152xf32>
    %c0_5 = arith.constant 0 : index
    %c0_6 = arith.constant 0 : index
    %3 = vector.load %arg4[%c0_5, %c0_6] : memref<1x1152xf32, #tpu.memory_space<vmem>>, vector<1x1152xf32>
    %4 = vector.broadcast %2 : vector<1x1152xf32> to vector<2x1152xf32>
    %5 = arith.mulf %0, %4 : vector<2x1152xf32>
    %6 = vector.broadcast %3 : vector<1x1152xf32> to vector<2x1152xf32>
    %7 = arith.mulf %1, %6 : vector<2x1152xf32>
    %8 = arith.subf %5, %7 : vector<2x1152xf32>
    %c0_7 = arith.constant 0 : index
    %c0_8 = arith.constant 0 : index
    %9 = vector.load %arg5[%c0_7, %c0_8] : memref<1x1152xf32, #tpu.memory_space<vmem>>, vector<1x1152xf32>
    %10 = vector.broadcast %9 : vector<1x1152xf32> to vector<2x1152xf32>
    %11 = arith.addf %8, %10 : vector<2x1152xf32>
    %c0_9 = arith.constant 0 : index
    %c0_10 = arith.constant 0 : index
    %12 = vector.load %arg7[%c0_9, %c0_10] : memref<2x1152xf32, #tpu.memory_space<vmem>>, vector<2x1152xf32>
    tpu.vector_store %arg7[%c0_9, %c0_10], %11 {strides = array<i32>} : memref<2x1152xf32, #tpu.memory_space<vmem>>, vector<2x1152xf32>,
    %13 = vector.broadcast %3 : vector<1x1152xf32> to vector<2x1152xf32>
    %14 = arith.mulf %0, %13 : vector<2x1152xf32>
    %15 = vector.broadcast %2 : vector<1x1152xf32> to vector<2x1152xf32>
    %16 = arith.mulf %1, %15 : vector<2x1152xf32>
    %17 = arith.addf %14, %16 : vector<2x1152xf32>
    %c0_11 = arith.constant 0 : index
    %c0_12 = arith.constant 0 : index
    %18 = vector.load %arg6[%c0_11, %c0_12] : memref<1x1152xf32, #tpu.memory_space<vmem>>, vector<1x1152xf32>
    %19 = vector.broadcast %18 : vector<1x1152xf32> to vector<2x1152xf32>
    %20 = arith.addf %17, %19 : vector<2x1152xf32>
    %c0_13 = arith.constant 0 : index
    %c0_14 = arith.constant 0 : index
    %21 = vector.load %arg8[%c0_13, %c0_14] : memref<2x1152xf32, #tpu.memory_space<vmem>>, vector<2x1152xf32>
    tpu.vector_store %arg8[%c0_13, %c0_14], %20 {strides = array<i32>} : memref<2x1152xf32, #tpu.memory_space<vmem>>, vector<2x1152xf32>,
    return
  }
  func.func @transform_0(%arg0: i32) -> (i32, i32) {
    %c0_i32 = arith.constant 0 : i32
    %c0_i32_0 = arith.constant 0 : i32
    return %c0_i32, %arg0 : i32, i32
  }
  func.func @transform_1(%arg0: i32) -> (i32, i32) {
    %c0_i32 = arith.constant 0 : i32
    %c0_i32_0 = arith.constant 0 : i32
    return %c0_i32, %arg0 : i32, i32
  }
  func.func @transform_2(%arg0: i32) -> (i32, i32) {
    %c0_i32 = arith.constant 0 : i32
    %c0_i32_0 = arith.constant 0 : i32
    return %c0_i32, %arg0 : i32, i32
  }
  func.func @transform_3(%arg0: i32) -> (i32, i32) {
    %c0_i32 = arith.constant 0 : i32
    %c0_i32_0 = arith.constant 0 : i32
    return %c0_i32, %arg0 : i32, i32
  }
  func.func @transform_4(%arg0: i32) -> (i32, i32) {
    %c0_i32 = arith.constant 0 : i32
    %c0_i32_0 = arith.constant 0 : i32
    return %c0_i32, %arg0 : i32, i32
  }
  func.func @transform_5(%arg0: i32) -> (i32, i32) {
    %c0_i32 = arith.constant 0 : i32
    %c0_i32_0 = arith.constant 0 : i32
    return %c0_i32, %arg0 : i32, i32
  }
  func.func @transform_6(%arg0: i32) -> (i32, i32) {
    %c0_i32 = arith.constant 0 : i32
    %c0_i32_0 = arith.constant 0 : i32
    return %c0_i32, %arg0 : i32, i32
  }
  func.func @transform_7(%arg0: i32) -> (i32, i32) {
    %c0_i32 = arith.constant 0 : i32
    %c0_i32_0 = arith.constant 0 : i32
    return %c0_i32, %arg0 : i32, i32
  }
}

</mosaic_0001>

<llo_original>
// kernel: tpu_custom_call.1
$region0: #{tpu_custom_call.1}
  #allocation0 [shape = 'u32[]', space=smem, size = 0x4, offset = 0x4, fixed_abs, tag = 'smem constant byte address 0x4 - core index']
  #allocation1 [shape = 'u32[144,128]{1,0:T(1,128)}', space=vmem, size = 0x12000, scoped, tag = 'internal scratch']
  %s0 = inlined_call_operand.hbm [shape: f32[2,2304], index: 0, kind: input, shape index: {}]
  %s1 = inlined_call_operand.hbm [shape: f32[2,2304], index: 1, kind: input, shape index: {}]
  %s2 = inlined_call_operand.hbm [shape: f32[1,2304], index: 2, kind: input, shape index: {}]
  %s3 = inlined_call_operand.hbm [shape: f32[1,2304], index: 3, kind: input, shape index: {}]
  %s4 = inlined_call_operand.hbm [shape: f32[1,2304], index: 4, kind: input, shape index: {}]
  %s5 = inlined_call_operand.hbm [shape: f32[1,2304], index: 5, kind: input, shape index: {}]
  %s6 = inlined_call_operand.hbm [shape: f32[2,2304], index: 6, kind: output, shape index: {0}]
  %s7 = inlined_call_operand.hbm [shape: f32[2,2304], index: 7, kind: output, shape index: {1}]
  %8 = xla_tuple %s6, %s7
  %s9 = sld [smem:[#allocation0]]
  $region89: #{tpu_custom_call.1} parent=0
    _
  %s11 = ssub.s32 1, %s9
  %s12 = scalar_select 0, %s11, %s9
  $region1: #{tpu_custom_call.1} parent=0
    #allocation2 [shape = 'u8[18432]{0}', space=vmem, size = 0x4800, scoped, tag = 'input window, operand 0']
    #allocation3 [shape = 's32[2]{0}', space=sflag, size = 0x8, scoped, tag = 'scoped memory for tpu_custom_call.1']
    #allocation4 [shape = 's32[2]{0}', space=sflag, size = 0x8, scoped, tag = 'scoped memory for tpu_custom_call.1']
    #allocation5 [shape = 'u8[18432]{0}', space=vmem, size = 0x4800, scoped, tag = 'input window, operand 1']
    #allocation6 [shape = 's32[2]{0}', space=sflag, size = 0x8, scoped, tag = 'scoped memory for tpu_custom_call.1']
    #allocation7 [shape = 'u8[9216]{0}', space=vmem, size = 0x2400, scoped, tag = 'input window, operand 2']
    #allocation8 [shape = 'u8[9216]{0}', space=vmem, size = 0x2400, scoped, tag = 'input window, operand 3']
    #allocation9 [shape = 's32[2]{0}', space=sflag, size = 0x8, scoped, tag = 'scoped memory for tpu_custom_call.1']
    #allocation10 [shape = 'u8[9216]{0}', space=vmem, size = 0x2400, scoped, tag = 'input window, operand 4']
    #allocation11 [shape = 'u8[9216]{0}', space=vmem, size = 0x2400, scoped, tag = 'input window, operand 5']
    #allocation12 [shape = 's32[2]{0}', space=sflag, size = 0x8, scoped, tag = 'scoped memory for tpu_custom_call.1']
    #allocation13 [shape = 'u8[18432]{0}', space=vmem, size = 0x4800, scoped, tag = 'output window, operand 0']
    #allocation14 [shape = 'u8[18432]{0}', space=vmem, size = 0x4800, scoped, tag = 'output window, operand 1']
    #allocation15 [shape = 's32[2]{0}', space=sflag, size = 0x8, scoped, tag = 'scoped memory for tpu_custom_call.1']
    %13 = vsyncpa [#allocation3], 0
    %s14 = scalar_lea.sflag [#allocation3], 1
    %15 = vsyncpa %s14, 0
    %16 = vsyncpa [#allocation6], 0
    %s17 = scalar_lea.sflag [#allocation6], 1
    %18 = vsyncpa %s17, 0
    %19 = vsyncpa [#allocation9], 0
    %s20 = scalar_lea.sflag [#allocation9], 1
    %21 = vsyncpa %s20, 0
    %22 = vsyncpa [#allocation12], 0
    %s23 = scalar_lea.sflag [#allocation12], 1
    %24 = vsyncpa %s23, 0
    %25 = vsyncpa [#allocation4], 0
    %s26 = scalar_lea.sflag [#allocation4], 1
    %27 = vsyncpa %s26, 0
    %28 = vsyncpa [#allocation15], 0
    %s29 = scalar_lea.sflag [#allocation15], 1
    %30 = vsyncpa %s29, 0
    loop: start=0, step=1, limit=4
    $region2: #{tpu_custom_call.1} parent=1 // loop_pre_header
      _
    $region3: #{tpu_custom_call.1} parent=1 // loop_header
      %s32 = sphi 0, %s36
      %p33 = scmp.ge.s32.totalorder %s32, 4
      %s42 = sphi 0, %s44
      %s45 = sphi 0, %s42
      %s46 = sphi 0, %s45
      %s62 = sphi 0, %s46
      %s68 = sphi 0, %s70
      %s71 = sphi 0, %s68
      %s72 = sphi 0, %s71
      %s88 = sphi 0, %s72
      %s94 = sphi 0, %s96
      %s97 = sphi 0, %s94
      %s98 = sphi 0, %s97
      %s114 = sphi 0, %s98
      %s120 = sphi 0, %s122
      %s123 = sphi 0, %s120
      %s124 = sphi 0, %s123
      %s140 = sphi 0, %s124
      %s146 = sphi 0, %s148
      %s149 = sphi 0, %s146
      %s150 = sphi 0, %s149
      %s166 = sphi 0, %s150
      %s172 = sphi 0, %s174
      %s175 = sphi 0, %s172
      %s176 = sphi 0, %s175
      %s192 = sphi 0, %s176
      %s198 = sphi 0, %s200
      %s201 = sphi 0, %s198
      %s202 = sphi 0, %s201
      %s218 = sphi 0, %s202
      %s224 = sphi 0, %s226
      %s227 = sphi 0, %s224
      %s228 = sphi 0, %s227
      %s244 = sphi 0, %s228
    $region4: #{tpu_custom_call.1} parent=1 // loop_header_branch
      %35 = sbr.rel (%p33) target = $region8
    $region5: #{tpu_custom_call.1} parent=1 // loop_body
      %s37 = ssub.s32 %s32, 1
      %s38 = ssub.s32 %s32, 2
      %s39 = sadd.s32 %s32, 1
      %s40 = ssub.s32 %s32, %s39
      %p41 = scmp.eq.s32.totalorder %s40, 0
      %s43 = sadd.s32 %s42, 1
      %s44 = scalar_select %p41, %s42, %s43
      %p47 = pneg %p41
      %p48 = scmp.eq.s32.totalorder %s32, 1
      %p49 = por %p47, %p48
      %p50 = scmp.ne.s32.totalorder %s42, %s45
      %p51 = scmp.eq.s32.totalorder %s32, 0
      %p52 = por %p50, %p51
      %p53 = scmp.ne.s32.totalorder %s42, %s45
      %p54 = scmp.eq.s32.totalorder %s37, 1
      %p55 = por %p53, %p54
      %p56 = scmp.ne.s32.totalorder %s45, %s46
      %p57 = scmp.eq.s32.totalorder %s37, 0
      %p58 = por %p56, %p57
      %p59 = scmp.ne.s32.totalorder %s45, %s46
      %p60 = scmp.eq.s32.totalorder %s38, 1
      %p61 = por %p59, %p60
      %p63 = scmp.ne.s32.totalorder %s46, %s62
      %p64 = scmp.eq.s32.totalorder %s38, 0
      %p65 = por %p63, %p64
      %s66 = ssub.s32 %s32, %s39
      %p67 = scmp.eq.s32.totalorder %s66, 0
      %s69 = sadd.s32 %s68, 1
      %s70 = scalar_select %p67, %s68, %s69
      %p73 = pneg %p67
      %p74 = scmp.eq.s32.totalorder %s32, 1
      %p75 = por %p73, %p74
      %p76 = scmp.ne.s32.totalorder %s68, %s71
      %p77 = scmp.eq.s32.totalorder %s32, 0
      %p78 = por %p76, %p77
      %p79 = scmp.ne.s32.totalorder %s68, %s71
      %p80 = scmp.eq.s32.totalorder %s37, 1
      %p81 = por %p79, %p80
      %p82 = scmp.ne.s32.totalorder %s71, %s72
      %p83 = scmp.eq.s32.totalorder %s37, 0
      %p84 = por %p82, %p83
      %p85 = scmp.ne.s32.totalorder %s71, %s72
      %p86 = scmp.eq.s32.totalorder %s38, 1
      %p87 = por %p85, %p86
      %p89 = scmp.ne.s32.totalorder %s72, %s88
      %p90 = scmp.eq.s32.totalorder %s38, 0
      %p91 = por %p89, %p90
      %s92 = ssub.s32 %s32, %s39
      %p93 = scmp.eq.s32.totalorder %s92, 0
      %s95 = sadd.s32 %s94, 1
      %s96 = scalar_select %p93, %s94, %s95
      %p99 = pneg %p93
      %p100 = scmp.eq.s32.totalorder %s32, 1
      %p101 = por %p99, %p100
      %p102 = scmp.ne.s32.totalorder %s94, %s97
      %p103 = scmp.eq.s32.totalorder %s32, 0
      %p104 = por %p102, %p103
      %p105 = scmp.ne.s32.totalorder %s94, %s97
      %p106 = scmp.eq.s32.totalorder %s37, 1
      %p107 = por %p105, %p106
      %p108 = scmp.ne.s32.totalorder %s97, %s98
      %p109 = scmp.eq.s32.totalorder %s37, 0
      %p110 = por %p108, %p109
      %p111 = scmp.ne.s32.totalorder %s97, %s98
      %p112 = scmp.eq.s32.totalorder %s38, 1
      %p113 = por %p111, %p112
      %p115 = scmp.ne.s32.totalorder %s98, %s114
      %p116 = scmp.eq.s32.totalorder %s38, 0
      %p117 = por %p115, %p116
      %s118 = ssub.s32 %s32, %s39
      %p119 = scmp.eq.s32.totalorder %s118, 0
      %s121 = sadd.s32 %s120, 1
      %s122 = scalar_select %p119, %s120, %s121
      %p125 = pneg %p119
      %p126 = scmp.eq.s32.totalorder %s32, 1
      %p127 = por %p125, %p126
      %p128 = scmp.ne.s32.totalorder %s120, %s123
      %p129 = scmp.eq.s32.totalorder %s32, 0
      %p130 = por %p128, %p129
      %p131 = scmp.ne.s32.totalorder %s120, %s123
      %p132 = scmp.eq.s32.totalorder %s37, 1
      %p133 = por %p131, %p132
      %p134 = scmp.ne.s32.totalorder %s123, %s124
      %p135 = scmp.eq.s32.totalorder %s37, 0
      %p136 = por %p134, %p135
      %p137 = scmp.ne.s32.totalorder %s123, %s124
      %p138 = scmp.eq.s32.totalorder %s38, 1
      %p139 = por %p137, %p138
      %p141 = scmp.ne.s32.totalorder %s124, %s140
      %p142 = scmp.eq.s32.totalorder %s38, 0
      %p143 = por %p141, %p142
      %s144 = ssub.s32 %s32, %s39
      %p145 = scmp.eq.s32.totalorder %s144, 0
      %s147 = sadd.s32 %s146, 1
      %s148 = scalar_select %p145, %s146, %s147
      %p151 = pneg %p145
      %p152 = scmp.eq.s32.totalorder %s32, 1
      %p153 = por %p151, %p152
      %p154 = scmp.ne.s32.totalorder %s146, %s149
      %p155 = scmp.eq.s32.totalorder %s32, 0
      %p156 = por %p154, %p155
      %p157 = scmp.ne.s32.totalorder %s146, %s149
      %p158 = scmp.eq.s32.totalorder %s37, 1
      %p159 = por %p157, %p158
      %p160 = scmp.ne.s32.totalorder %s149, %s150
      %p161 = scmp.eq.s32.totalorder %s37, 0
      %p162 = por %p160, %p161
      %p163 = scmp.ne.s32.totalorder %s149, %s150
      %p164 = scmp.eq.s32.totalorder %s38, 1
      %p165 = por %p163, %p164
      %p167 = scmp.ne.s32.totalorder %s150, %s166
      %p168 = scmp.eq.s32.totalorder %s38, 0
      %p169 = por %p167, %p168
      %s170 = ssub.s32 %s32, %s39
      %p171 = scmp.eq.s32.totalorder %s170, 0
      %s173 = sadd.s32 %s172, 1
      %s174 = scalar_select %p171, %s172, %s173
      %p177 = pneg %p171
      %p178 = scmp.eq.s32.totalorder %s32, 1
      %p179 = por %p177, %p178
      %p180 = scmp.ne.s32.totalorder %s172, %s175
      %p181 = scmp.eq.s32.totalorder %s32, 0
      %p182 = por %p180, %p181
      %p183 = scmp.ne.s32.totalorder %s172, %s175
      %p184 = scmp.eq.s32.totalorder %s37, 1
      %p185 = por %p183, %p184
      %p186 = scmp.ne.s32.totalorder %s175, %s176
      %p187 = scmp.eq.s32.totalorder %s37, 0
      %p188 = por %p186, %p187
      %p189 = scmp.ne.s32.totalorder %s175, %s176
      %p190 = scmp.eq.s32.totalorder %s38, 1
      %p191 = por %p189, %p190
      %p193 = scmp.ne.s32.totalorder %s176, %s192
      %p194 = scmp.eq.s32.totalorder %s38, 0
      %p195 = por %p193, %p194
      %s196 = ssub.s32 %s32, %s39
      %p197 = scmp.eq.s32.totalorder %s196, 0
      %s199 = sadd.s32 %s198, 1
      %s200 = scalar_select %p197, %s198, %s199
      %p203 = pneg %p197
      %p204 = scmp.eq.s32.totalorder %s32, 1
      %p205 = por %p203, %p204
      %p206 = scmp.ne.s32.totalorder %s198, %s201
      %p207 = scmp.eq.s32.totalorder %s32, 0
      %p208 = por %p206, %p207
      %p209 = scmp.ne.s32.totalorder %s198, %s201
      %p210 = scmp.eq.s32.totalorder %s37, 1
      %p211 = por %p209, %p210
      %p212 = scmp.ne.s32.totalorder %s201, %s202
      %p213 = scmp.eq.s32.totalorder %s37, 0
      %p214 = por %p212, %p213
      %p215 = scmp.ne.s32.totalorder %s201, %s202
      %p216 = scmp.eq.s32.totalorder %s38, 1
      %p217 = por %p215, %p216
      %p219 = scmp.ne.s32.totalorder %s202, %s218
      %p220 = scmp.eq.s32.totalorder %s38, 0
      %p221 = por %p219, %p220
      %s222 = ssub.s32 %s32, %s39
      %p223 = scmp.eq.s32.totalorder %s222, 0
      %s225 = sadd.s32 %s224, 1
      %s226 = scalar_select %p223, %s224, %s225
      %p229 = pneg %p223
      %p230 = scmp.eq.s32.totalorder %s32, 1
      %p231 = por %p229, %p230
      %p232 = scmp.ne.s32.totalorder %s224, %s227
      %p233 = scmp.eq.s32.totalorder %s32, 0
      %p234 = por %p232, %p233
      %p235 = scmp.ne.s32.totalorder %s224, %s227
      %p236 = scmp.eq.s32.totalorder %s37, 1
      %p237 = por %p235, %p236
      %p238 = scmp.ne.s32.totalorder %s227, %s228
      %p239 = scmp.eq.s32.totalorder %s37, 0
      %p240 = por %p238, %p239
      %p241 = scmp.ne.s32.totalorder %s227, %s228
      %p242 = scmp.eq.s32.totalorder %s38, 1
      %p243 = por %p241, %p242
      %p245 = scmp.ne.s32.totalorder %s228, %s244
      %p246 = scmp.eq.s32.totalorder %s38, 0
      %p247 = por %p245, %p246
      %p248 = scmp.le.s32.totalorder 1, %s32
      %p249 = scmp.lt.s32.totalorder %s32, 3
      %p250 = pnand %p248, %p249
      %p251 = pneg %p250
      // Predicated region
      $region9: #{tpu_custom_call.1} parent=5 // pred_check
        _
      $region10: #{tpu_custom_call.1} parent=5 // pred_check_branch
        %253 = sbr.rel (%p250) target = $region12
      $region11: #{tpu_custom_call.1} parent=5 // pred_region
        %s254 = ssub.s32 %s32, 1
      $region12: #{tpu_custom_call.1} parent=5 // pred_fallthru
        _
      %p255 = scmp.lt.s32.totalorder %s32, 2
      // Predicated region
      $region13: #{tpu_custom_call.1} parent=5 // pred_check
        %p256 = pneg %p255
      $region14: #{tpu_custom_call.1} parent=5 // pred_check_branch
        %258 = sbr.rel (%p256) target = $region16
      $region15: #{tpu_custom_call.1} parent=5 // pred_region
        // Predicated region
        $region17: #{tpu_custom_call.1} parent=15 // pred_check
          %p259 = pneg %p52
        $region18: #{tpu_custom_call.1} parent=15 // pred_check_branch
          %261 = sbr.rel (%p259) target = $region20
        $region19: #{tpu_custom_call.1} parent=15 // pred_region
          %s262 = sand.u32 %s42, 1
          %s263 = scalar_lea.sflag [#allocation3], %s262
          %s264 = sand.u32 %s42, 1
          %s265 = smul.addr %s264, 18
          %s266 = scalar_lea.vmem [#allocation2], %s265
          %s267 = smul.u32 9, %s32
          %s269 = ssub.s32 288, 288
          %270 = vsyncadd %s263, %s269
          %s271 = smul.addr %s267, 32
          %s272 = scalar_lea.hbm %s0, %s271
          %s274 = sshll.u32 %s266, 4
          %s275 = int_to_ptr.vmem [resolvable:$true] %s274
          %277 = dma.hbm_to_vmem [thread:$0]  %s272, 288, %s275, %s263
        $region20: #{tpu_custom_call.1} parent=15 // pred_fallthru
          _
        // Predicated region
        $region21: #{tpu_custom_call.1} parent=15 // pred_check
          %p278 = pneg %p78
        $region22: #{tpu_custom_call.1} parent=15 // pred_check_branch
          %280 = sbr.rel (%p278) target = $region24
        $region23: #{tpu_custom_call.1} parent=15 // pred_region
          %s281 = sand.u32 %s32, 1
          %s282 = scalar_lea.sflag [#allocation6], %s281
          %s283 = sand.u32 %s68, 1
          %s284 = smul.addr %s283, 18
          %s285 = scalar_lea.vmem [#allocation5], %s284
          %s286 = smul.u32 9, %s32
          %s288 = ssub.s32 288, 288
          %289 = vsyncadd %s282, %s288
          %s290 = smul.addr %s286, 32
          %s291 = scalar_lea.hbm %s1, %s290
          %s293 = sshll.u32 %s285, 4
          %s294 = int_to_ptr.vmem [resolvable:$true] %s293
          %296 = dma.hbm_to_vmem [thread:$0]  %s291, 288, %s294, %s282
        $region24: #{tpu_custom_call.1} parent=15 // pred_fallthru
          _
        // Predicated region
        $region25: #{tpu_custom_call.1} parent=15 // pred_check
          %p297 = pneg %p104
        $region26: #{tpu_custom_call.1} parent=15 // pred_check_branch
          %299 = sbr.rel (%p297) target = $region28
        $region27: #{tpu_custom_call.1} parent=15 // pred_region
          %s300 = sand.u32 %s32, 1
          %s301 = scalar_lea.sflag [#allocation6], %s300
          %s302 = sand.u32 %s94, 1
          %s303 = smul.addr %s302, 9
          %s304 = scalar_lea.vmem [#allocation7], %s303
          %s305 = smul.u32 9, %s32
          %s307 = ssub.s32 144, 144
          %308 = vsyncadd %s301, %s307
          %s309 = smul.addr %s305, 16
          %s310 = scalar_lea.hbm %s2, %s309
          %s312 = sshll.u32 %s304, 4
          %s313 = int_to_ptr.vmem [resolvable:$true] %s312
          %315 = dma.hbm_to_vmem [thread:$0]  %s310, 144, %s313, %s301
        $region28: #{tpu_custom_call.1} parent=15 // pred_fallthru
          _
        // Predicated region
        $region29: #{tpu_custom_call.1} parent=15 // pred_check
          %p316 = pneg %p130
        $region30: #{tpu_custom_call.1} parent=15 // pred_check_branch
          %318 = sbr.rel (%p316) target = $region32
        $region31: #{tpu_custom_call.1} parent=15 // pred_region
          %s319 = sand.u32 %s32, 1
          %s320 = scalar_lea.sflag [#allocation9], %s319
          %s321 = sand.u32 %s120, 1
          %s322 = smul.addr %s321, 9
          %s323 = scalar_lea.vmem [#allocation8], %s322
          %s324 = smul.u32 9, %s32
          %s326 = ssub.s32 144, 144
          %327 = vsyncadd %s320, %s326
          %s328 = smul.addr %s324, 16
          %s329 = scalar_lea.hbm %s3, %s328
          %s331 = sshll.u32 %s323, 4
          %s332 = int_to_ptr.vmem [resolvable:$true] %s331
          %334 = dma.hbm_to_vmem [thread:$0]  %s329, 144, %s332, %s320
        $region32: #{tpu_custom_call.1} parent=15 // pred_fallthru
          _
        // Predicated region
        $region33: #{tpu_custom_call.1} parent=15 // pred_check
          %p335 = pneg %p156
        $region34: #{tpu_custom_call.1} parent=15 // pred_check_branch
          %337 = sbr.rel (%p335) target = $region36
        $region35: #{tpu_custom_call.1} parent=15 // pred_region
          %s338 = sand.u32 %s32, 1
          %s339 = scalar_lea.sflag [#allocation9], %s338
          %s340 = sand.u32 %s146, 1
          %s341 = smul.addr %s340, 9
          %s342 = scalar_lea.vmem [#allocation10], %s341
          %s343 = smul.u32 9, %s32
          %s345 = ssub.s32 144, 144
          %346 = vsyncadd %s339, %s345
          %s347 = smul.addr %s343, 16
          %s348 = scalar_lea.hbm %s4, %s347
          %s350 = sshll.u32 %s342, 4
          %s351 = int_to_ptr.vmem [resolvable:$true] %s350
          %353 = dma.hbm_to_vmem [thread:$0]  %s348, 144, %s351, %s339
        $region36: #{tpu_custom_call.1} parent=15 // pred_fallthru
          _
        // Predicated region
        $region37: #{tpu_custom_call.1} parent=15 // pred_check
          %p354 = pneg %p182
        $region38: #{tpu_custom_call.1} parent=15 // pred_check_branch
          %356 = sbr.rel (%p354) target = $region40
        $region39: #{tpu_custom_call.1} parent=15 // pred_region
          %s357 = sand.u32 %s172, 1
          %s358 = scalar_lea.sflag [#allocation12], %s357
          %s359 = sand.u32 %s172, 1
          %s360 = smul.addr %s359, 9
          %s361 = scalar_lea.vmem [#allocation11], %s360
          %s362 = smul.u32 9, %s32
          %s364 = ssub.s32 144, 144
          %365 = vsyncadd %s358, %s364
          %s366 = smul.addr %s362, 16
          %s367 = scalar_lea.hbm %s5, %s366
          %s369 = sshll.u32 %s361, 4
          %s370 = int_to_ptr.vmem [resolvable:$true] %s369
          %372 = dma.hbm_to_vmem [thread:$0]  %s367, 144, %s370, %s358
        $region40: #{tpu_custom_call.1} parent=15 // pred_fallthru
          _
      $region16: #{tpu_custom_call.1} parent=5 // pred_fallthru
        _
      %p373 = scmp.le.s32.totalorder 1, %s32
      %p374 = scmp.lt.s32.totalorder %s32, 3
      %p375 = pnand %p373, %p374
      %p376 = pneg %p375
      // Predicated region
      $region41: #{tpu_custom_call.1} parent=5 // pred_check
        _
      $region42: #{tpu_custom_call.1} parent=5 // pred_check_branch
        %378 = sbr.rel (%p375) target = $region44
      $region43: #{tpu_custom_call.1} parent=5 // pred_region
        %s379 = ssub.s32 %s32, 1
        %s380 = sand.u32 %s45, 1
        %s381 = scalar_lea.sflag [#allocation3], %s380
        %s382 = sand.u32 %s45, 1
        %s383 = smul.addr %s382, 18
        %s384 = scalar_lea.vmem [#allocation2], %s383
        // Predicated region
        $region45: #{tpu_custom_call.1} parent=43 // pred_check
          %p385 = pneg %p58
        $region46: #{tpu_custom_call.1} parent=43 // pred_check_branch
          %387 = sbr.rel (%p385) target = $region48
        $region47: #{tpu_custom_call.1} parent=43 // pred_region
          %388 = dma.done %s381, 288
        $region48: #{tpu_custom_call.1} parent=43 // pred_fallthru
          _
        %s389 = sand.u32 %s37, 1
        %s390 = scalar_lea.sflag [#allocation6], %s389
        %s391 = sand.u32 %s71, 1
        %s392 = smul.addr %s391, 18
        %s393 = scalar_lea.vmem [#allocation5], %s392
        // Predicated region
        $region49: #{tpu_custom_call.1} parent=43 // pred_check
          %p394 = pneg %p84
        $region50: #{tpu_custom_call.1} parent=43 // pred_check_branch
          %396 = sbr.rel (%p394) target = $region52
        $region51: #{tpu_custom_call.1} parent=43 // pred_region
          %397 = dma.done %s390, 288
        $region52: #{tpu_custom_call.1} parent=43 // pred_fallthru
          _
        %s398 = sand.u32 %s37, 1
        %s399 = scalar_lea.sflag [#allocation6], %s398
        %s400 = sand.u32 %s97, 1
        %s401 = smul.addr %s400, 9
        %s402 = scalar_lea.vmem [#allocation7], %s401
        // Predicated region
        $region53: #{tpu_custom_call.1} parent=43 // pred_check
          %p403 = pneg %p110
        $region54: #{tpu_custom_call.1} parent=43 // pred_check_branch
          %405 = sbr.rel (%p403) target = $region56
        $region55: #{tpu_custom_call.1} parent=43 // pred_region
          %406 = dma.done %s399, 144
        $region56: #{tpu_custom_call.1} parent=43 // pred_fallthru
          _
        %s407 = sand.u32 %s37, 1
        %s408 = scalar_lea.sflag [#allocation9], %s407
        %s409 = sand.u32 %s123, 1
        %s410 = smul.addr %s409, 9
        %s411 = scalar_lea.vmem [#allocation8], %s410
        // Predicated region
        $region57: #{tpu_custom_call.1} parent=43 // pred_check
          %p412 = pneg %p136
        $region58: #{tpu_custom_call.1} parent=43 // pred_check_branch
          %414 = sbr.rel (%p412) target = $region60
        $region59: #{tpu_custom_call.1} parent=43 // pred_region
          %415 = dma.done %s408, 144
        $region60: #{tpu_custom_call.1} parent=43 // pred_fallthru
          _
        %s416 = sand.u32 %s37, 1
        %s417 = scalar_lea.sflag [#allocation9], %s416
        %s418 = sand.u32 %s149, 1
        %s419 = smul.addr %s418, 9
        %s420 = scalar_lea.vmem [#allocation10], %s419
        // Predicated region
        $region61: #{tpu_custom_call.1} parent=43 // pred_check
          %p421 = pneg %p162
        $region62: #{tpu_custom_call.1} parent=43 // pred_check_branch
          %423 = sbr.rel (%p421) target = $region64
        $region63: #{tpu_custom_call.1} parent=43 // pred_region
          %424 = dma.done %s417, 144
        $region64: #{tpu_custom_call.1} parent=43 // pred_fallthru
          _
        %s425 = sand.u32 %s175, 1
        %s426 = scalar_lea.sflag [#allocation12], %s425
        %s427 = sand.u32 %s175, 1
        %s428 = smul.addr %s427, 9
        %s429 = scalar_lea.vmem [#allocation11], %s428
        // Predicated region
        $region65: #{tpu_custom_call.1} parent=43 // pred_check
          %p430 = pneg %p188
        $region66: #{tpu_custom_call.1} parent=43 // pred_check_branch
          %432 = sbr.rel (%p430) target = $region68
        $region67: #{tpu_custom_call.1} parent=43 // pred_region
          %433 = dma.done %s426, 144
        $region68: #{tpu_custom_call.1} parent=43 // pred_fallthru
          _
        %s434 = sand.u32 %s45, 1
        %s435 = scalar_lea.sflag [#allocation3], %s434
        %s436 = sand.u32 %s45, 1
        %s437 = smul.addr %s436, 18
        %s438 = scalar_lea.vmem [#allocation2], %s437
        %p439 = pneg %p58
        %p440 = pneg %p55
        %s441 = sand.u32 %s37, 1
        %s442 = scalar_lea.sflag [#allocation6], %s441
        %s443 = sand.u32 %s71, 1
        %s444 = smul.addr %s443, 18
        %s445 = scalar_lea.vmem [#allocation5], %s444
        %p446 = pneg %p84
        %p447 = pneg %p81
        %s448 = sand.u32 %s37, 1
        %s449 = scalar_lea.sflag [#allocation6], %s448
        %s450 = sand.u32 %s97, 1
        %s451 = smul.addr %s450, 9
        %s452 = scalar_lea.vmem [#allocation7], %s451
        %p453 = pneg %p110
        %p454 = pneg %p107
        %s455 = sand.u32 %s37, 1
        %s456 = scalar_lea.sflag [#allocation9], %s455
        %s457 = sand.u32 %s123, 1
        %s458 = smul.addr %s457, 9
        %s459 = scalar_lea.vmem [#allocation8], %s458
        %p460 = pneg %p136
        %p461 = pneg %p133
        %s462 = sand.u32 %s37, 1
        %s463 = scalar_lea.sflag [#allocation9], %s462
        %s464 = sand.u32 %s149, 1
        %s465 = smul.addr %s464, 9
        %s466 = scalar_lea.vmem [#allocation10], %s465
        %p467 = pneg %p162
        %p468 = pneg %p159
        %s469 = sand.u32 %s175, 1
        %s470 = scalar_lea.sflag [#allocation12], %s469
        %s471 = sand.u32 %s175, 1
        %s472 = smul.addr %s471, 9
        %s473 = scalar_lea.vmem [#allocation11], %s472
        %p474 = pneg %p188
        %p475 = pneg %p185
        %p476 = pneg %p214
        %p477 = pneg %p211
        %s478 = sand.u32 %s201, 1
        %s479 = scalar_lea.sflag [#allocation4], %s478
        %s480 = sand.u32 %s201, 1
        %s481 = smul.addr %s480, 18
        %s482 = scalar_lea.vmem [#allocation13], %s481
        %p483 = pneg %p240
        %p484 = pneg %p237
        %s485 = sand.u32 %s227, 1
        %s486 = scalar_lea.sflag [#allocation15], %s485
        %s487 = sand.u32 %s227, 1
        %s488 = smul.addr %s487, 18
        %s489 = scalar_lea.vmem [#allocation14], %s488
        %s490 = smul.u32 9, %s37
        %s491 = smul.u32 9, %s37
        %s492 = smul.u32 9, %s37
        %s493 = smul.u32 9, %s37
        %s494 = smul.u32 9, %s37
        %s495 = smul.u32 9, %s37
        %s496 = smul.u32 9, %s37
        %s497 = smul.u32 9, %s37
        %v498 = vld [vmem:[%s384] sm:$0xff]
        %v499 = vld [vmem:[%s384 + $0x8] sm:$0xff]
        %v500 = vld [vmem:[%s384 + $0x10] sm:$0x3]
        %v501 = vld [vmem:[%s393] sm:$0xff]
        %v502 = vld [vmem:[%s393 + $0x8] sm:$0xff]
        %v503 = vld [vmem:[%s393 + $0x10] sm:$0x3]
        %v504 = vld [vmem:[%s402] sm:$0xff]
        %v505 = vld [vmem:[%s402 + $0x8] sm:$0x1]
        %v506 = vld [vmem:[%s411] sm:$0xff]
        %v507 = vld [vmem:[%s411 + $0x8] sm:$0x1]
        %v510 = vlaneseq
        %v511 = vshrl.u32 %v510, 7
        %v512 = vsub.s32 0, %v511
        %v513 = vrot.slane %v504, %v512
        %v514 = vlaneseq
        %v515 = vshrl.u32 %v514, 7
        %v516 = vsub.s32 1, %v515
        %v517 = vrot.slane %v504, %v516
        %v518 = vlaneseq
        %v519 = vshrl.u32 %v518, 7
        %v520 = vsub.s32 2, %v519
        %v521 = vrot.slane %v504, %v520
        %v522 = vlaneseq
        %v523 = vshrl.u32 %v522, 7
        %v524 = vsub.s32 3, %v523
        %v525 = vrot.slane %v504, %v524
        %v526 = vlaneseq
        %v527 = vshrl.u32 %v526, 7
        %v528 = vsub.s32 4, %v527
        %v529 = vrot.slane %v504, %v528
        %v530 = vlaneseq
        %v531 = vshrl.u32 %v530, 7
        %v532 = vsub.s32 5, %v531
        %v533 = vrot.slane %v504, %v532
        %v534 = vlaneseq
        %v535 = vshrl.u32 %v534, 7
        %v536 = vsub.s32 6, %v535
        %v537 = vrot.slane %v504, %v536
        %v538 = vlaneseq
        %v539 = vshrl.u32 %v538, 7
        %v540 = vsub.s32 7, %v539
        %v541 = vrot.slane %v504, %v540
        %v542 = vlaneseq
        %v543 = vshrl.u32 %v542, 7
        %v544 = vsub.s32 0, %v543
        %v545 = vrot.slane %v505, %v544
        %v546 = vcombine.low %v513, %v517
        %v547 = vcombine.low %v521, %v525
        %v549 = vunpack.c.l.s4 1983009808
        %v550 = vunpack.c.0.s8 %v549
        %v551 = vlaneseq
        %v552 = vshrl.u32 %v551, 7
        %v553 = vsub.s32 %v550, %v552
        %v554 = vrot.slane %v546, %v553
        %v556 = vunpack.c.l.s4 1983009808
        %v557 = vunpack.c.0.s8 %v556
        %v558 = vlaneseq
        %v559 = vshrl.u32 %v558, 7
        %v560 = vsub.s32 %v557, %v559
        %v561 = vrot.slane %v547, %v560
        %v562 = vcombine.low %v554, %v561
        %v563 = vcombine.low %v529, %v533
        %v564 = vcombine.low %v537, %v541
        %v566 = vunpack.c.l.s4 1983009808
        %v567 = vunpack.c.0.s8 %v566
        %v568 = vlaneseq
        %v569 = vshrl.u32 %v568, 7
        %v570 = vsub.s32 %v567, %v569
        %v571 = vrot.slane %v563, %v570
        %v573 = vunpack.c.l.s4 1983009808
        %v574 = vunpack.c.0.s8 %v573
        %v575 = vlaneseq
        %v576 = vshrl.u32 %v575, 7
        %v577 = vsub.s32 %v574, %v576
        %v578 = vrot.slane %v564, %v577
        %v579 = vcombine.low %v571, %v578
        %v581 = vunpack.c.l.s4 1983009808
        %v582 = vunpack.c.0.s8 %v581
        %v583 = vlaneseq
        %v584 = vshrl.u32 %v583, 7
        %v585 = vsub.s32 %v582, %v584
        %v586 = vrot.slane %v545, %v585
        %v590 = vmul.f32 %v498, %v562
        %v591 = vmul.f32 %v499, %v579
        %v592 = vmul.f32 %v500, %v586
        %v595 = vlaneseq
        %v596 = vshrl.u32 %v595, 7
        %v597 = vsub.s32 0, %v596
        %v598 = vrot.slane %v506, %v597
        %v599 = vlaneseq
        %v600 = vshrl.u32 %v599, 7
        %v601 = vsub.s32 1, %v600
        %v602 = vrot.slane %v506, %v601
        %v603 = vlaneseq
        %v604 = vshrl.u32 %v603, 7
        %v605 = vsub.s32 2, %v604
        %v606 = vrot.slane %v506, %v605
        %v607 = vlaneseq
        %v608 = vshrl.u32 %v607, 7
        %v609 = vsub.s32 3, %v608
        %v610 = vrot.slane %v506, %v609
        %v611 = vlaneseq
        %v612 = vshrl.u32 %v611, 7
        %v613 = vsub.s32 4, %v612
        %v614 = vrot.slane %v506, %v613
        %v615 = vlaneseq
        %v616 = vshrl.u32 %v615, 7
        %v617 = vsub.s32 5, %v616
        %v618 = vrot.slane %v506, %v617
        %v619 = vlaneseq
        %v620 = vshrl.u32 %v619, 7
        %v621 = vsub.s32 6, %v620
        %v622 = vrot.slane %v506, %v621
        %v623 = vlaneseq
        %v624 = vshrl.u32 %v623, 7
        %v625 = vsub.s32 7, %v624
        %v626 = vrot.slane %v506, %v625
        %v627 = vlaneseq
        %v628 = vshrl.u32 %v627, 7
        %v629 = vsub.s32 0, %v628
        %v630 = vrot.slane %v507, %v629
        %v631 = vcombine.low %v598, %v602
        %v632 = vcombine.low %v606, %v610
        %v634 = vunpack.c.l.s4 1983009808
        %v635 = vunpack.c.0.s8 %v634
        %v636 = vlaneseq
        %v637 = vshrl.u32 %v636, 7
        %v638 = vsub.s32 %v635, %v637
        %v639 = vrot.slane %v631, %v638
        %v641 = vunpack.c.l.s4 1983009808
        %v642 = vunpack.c.0.s8 %v641
        %v643 = vlaneseq
        %v644 = vshrl.u32 %v643, 7
        %v645 = vsub.s32 %v642, %v644
        %v646 = vrot.slane %v632, %v645
        %v647 = vcombine.low %v639, %v646
        %v648 = vcombine.low %v614, %v618
        %v649 = vcombine.low %v622, %v626
        %v651 = vunpack.c.l.s4 1983009808
        %v652 = vunpack.c.0.s8 %v651
        %v653 = vlaneseq
        %v654 = vshrl.u32 %v653, 7
        %v655 = vsub.s32 %v652, %v654
        %v656 = vrot.slane %v648, %v655
        %v658 = vunpack.c.l.s4 1983009808
        %v659 = vunpack.c.0.s8 %v658
        %v660 = vlaneseq
        %v661 = vshrl.u32 %v660, 7
        %v662 = vsub.s32 %v659, %v661
        %v663 = vrot.slane %v649, %v662
        %v664 = vcombine.low %v656, %v663
        %v666 = vunpack.c.l.s4 1983009808
        %v667 = vunpack.c.0.s8 %v666
        %v668 = vlaneseq
        %v669 = vshrl.u32 %v668, 7
        %v670 = vsub.s32 %v667, %v669
        %v671 = vrot.slane %v630, %v670
        %v675 = vmul.f32 %v501, %v647
        %v676 = vmul.f32 %v502, %v664
        %v677 = vmul.f32 %v503, %v671
        %v678 = vsub.f32 %v590, %v675
        %v679 = vsub.f32 %v591, %v676
        %v680 = vsub.f32 %v592, %v677
        %v681 = vld [vmem:[%s420] sm:$0xff]
        %v682 = vld [vmem:[%s420 + $0x8] sm:$0x1]
        %v685 = vlaneseq
        %v686 = vshrl.u32 %v685, 7
        %v687 = vsub.s32 0, %v686
        %v688 = vrot.slane %v681, %v687
        %v689 = vlaneseq
        %v690 = vshrl.u32 %v689, 7
        %v691 = vsub.s32 1, %v690
        %v692 = vrot.slane %v681, %v691
        %v693 = vlaneseq
        %v694 = vshrl.u32 %v693, 7
        %v695 = vsub.s32 2, %v694
        %v696 = vrot.slane %v681, %v695
        %v697 = vlaneseq
        %v698 = vshrl.u32 %v697, 7
        %v699 = vsub.s32 3, %v698
        %v700 = vrot.slane %v681, %v699
        %v701 = vlaneseq
        %v702 = vshrl.u32 %v701, 7
        %v703 = vsub.s32 4, %v702
        %v704 = vrot.slane %v681, %v703
        %v705 = vlaneseq
        %v706 = vshrl.u32 %v705, 7
        %v707 = vsub.s32 5, %v706
        %v708 = vrot.slane %v681, %v707
        %v709 = vlaneseq
        %v710 = vshrl.u32 %v709, 7
        %v711 = vsub.s32 6, %v710
        %v712 = vrot.slane %v681, %v711
        %v713 = vlaneseq
        %v714 = vshrl.u32 %v713, 7
        %v715 = vsub.s32 7, %v714
        %v716 = vrot.slane %v681, %v715
        %v717 = vlaneseq
        %v718 = vshrl.u32 %v717, 7
        %v719 = vsub.s32 0, %v718
        %v720 = vrot.slane %v682, %v719
        %v721 = vcombine.low %v688, %v692
        %v722 = vcombine.low %v696, %v700
        %v724 = vunpack.c.l.s4 1983009808
        %v725 = vunpack.c.0.s8 %v724
        %v726 = vlaneseq
        %v727 = vshrl.u32 %v726, 7
        %v728 = vsub.s32 %v725, %v727
        %v729 = vrot.slane %v721, %v728
        %v731 = vunpack.c.l.s4 1983009808
        %v732 = vunpack.c.0.s8 %v731
        %v733 = vlaneseq
        %v734 = vshrl.u32 %v733, 7
        %v735 = vsub.s32 %v732, %v734
        %v736 = vrot.slane %v722, %v735
        %v737 = vcombine.low %v729, %v736
        %v738 = vcombine.low %v704, %v708
        %v739 = vcombine.low %v712, %v716
        %v741 = vunpack.c.l.s4 1983009808
        %v742 = vunpack.c.0.s8 %v741
        %v743 = vlaneseq
        %v744 = vshrl.u32 %v743, 7
        %v745 = vsub.s32 %v742, %v744
        %v746 = vrot.slane %v738, %v745
        %v748 = vunpack.c.l.s4 1983009808
        %v749 = vunpack.c.0.s8 %v748
        %v750 = vlaneseq
        %v751 = vshrl.u32 %v750, 7
        %v752 = vsub.s32 %v749, %v751
        %v753 = vrot.slane %v739, %v752
        %v754 = vcombine.low %v746, %v753
        %v756 = vunpack.c.l.s4 1983009808
        %v757 = vunpack.c.0.s8 %v756
        %v758 = vlaneseq
        %v759 = vshrl.u32 %v758, 7
        %v760 = vsub.s32 %v757, %v759
        %v761 = vrot.slane %v720, %v760
        %v765 = vadd.f32 %v678, %v737
        %v766 = vadd.f32 %v679, %v754
        %v767 = vadd.f32 %v680, %v761
        %768 = vst [vmem:[%s482] sm:$0xff] %v765
        %769 = vst [vmem:[%s482 + $0x8] sm:$0xff] %v766
        %770 = vst [vmem:[%s482 + $0x10] sm:$0x3] %v767
        %v771 = vmul.f32 %v498, %v647
        %v772 = vmul.f32 %v499, %v664
        %v773 = vmul.f32 %v500, %v671
        %v774 = vmul.f32 %v501, %v562
        %v775 = vmul.f32 %v502, %v579
        %v776 = vmul.f32 %v503, %v586
        %v777 = vadd.f32 %v771, %v774
        %v778 = vadd.f32 %v772, %v775
        %v779 = vadd.f32 %v773, %v776
        %v780 = vld [vmem:[%s429] sm:$0xff]
        %v781 = vld [vmem:[%s429 + $0x8] sm:$0x1]
        %v784 = vlaneseq
        %v785 = vshrl.u32 %v784, 7
        %v786 = vsub.s32 0, %v785
        %v787 = vrot.slane %v780, %v786
        %v788 = vlaneseq
        %v789 = vshrl.u32 %v788, 7
        %v790 = vsub.s32 1, %v789
        %v791 = vrot.slane %v780, %v790
        %v792 = vlaneseq
        %v793 = vshrl.u32 %v792, 7
        %v794 = vsub.s32 2, %v793
        %v795 = vrot.slane %v780, %v794
        %v796 = vlaneseq
        %v797 = vshrl.u32 %v796, 7
        %v798 = vsub.s32 3, %v797
        %v799 = vrot.slane %v780, %v798
        %v800 = vlaneseq
        %v801 = vshrl.u32 %v800, 7
        %v802 = vsub.s32 4, %v801
        %v803 = vrot.slane %v780, %v802
        %v804 = vlaneseq
        %v805 = vshrl.u32 %v804, 7
        %v806 = vsub.s32 5, %v805
        %v807 = vrot.slane %v780, %v806
        %v808 = vlaneseq
        %v809 = vshrl.u32 %v808, 7
        %v810 = vsub.s32 6, %v809
        %v811 = vrot.slane %v780, %v810
        %v812 = vlaneseq
        %v813 = vshrl.u32 %v812, 7
        %v814 = vsub.s32 7, %v813
        %v815 = vrot.slane %v780, %v814
        %v816 = vlaneseq
        %v817 = vshrl.u32 %v816, 7
        %v818 = vsub.s32 0, %v817
        %v819 = vrot.slane %v781, %v818
        %v820 = vcombine.low %v787, %v791
        %v821 = vcombine.low %v795, %v799
        %v823 = vunpack.c.l.s4 1983009808
        %v824 = vunpack.c.0.s8 %v823
        %v825 = vlaneseq
        %v826 = vshrl.u32 %v825, 7
        %v827 = vsub.s32 %v824, %v826
        %v828 = vrot.slane %v820, %v827
        %v830 = vunpack.c.l.s4 1983009808
        %v831 = vunpack.c.0.s8 %v830
        %v832 = vlaneseq
        %v833 = vshrl.u32 %v832, 7
        %v834 = vsub.s32 %v831, %v833
        %v835 = vrot.slane %v821, %v834
        %v836 = vcombine.low %v828, %v835
        %v837 = vcombine.low %v803, %v807
        %v838 = vcombine.low %v811, %v815
        %v840 = vunpack.c.l.s4 1983009808
        %v841 = vunpack.c.0.s8 %v840
        %v842 = vlaneseq
        %v843 = vshrl.u32 %v842, 7
        %v844 = vsub.s32 %v841, %v843
        %v845 = vrot.slane %v837, %v844
        %v847 = vunpack.c.l.s4 1983009808
        %v848 = vunpack.c.0.s8 %v847
        %v849 = vlaneseq
        %v850 = vshrl.u32 %v849, 7
        %v851 = vsub.s32 %v848, %v850
        %v852 = vrot.slane %v838, %v851
        %v853 = vcombine.low %v845, %v852
        %v855 = vunpack.c.l.s4 1983009808
        %v856 = vunpack.c.0.s8 %v855
        %v857 = vlaneseq
        %v858 = vshrl.u32 %v857, 7
        %v859 = vsub.s32 %v856, %v858
        %v860 = vrot.slane %v819, %v859
        %v864 = vadd.f32 %v777, %v836
        %v865 = vadd.f32 %v778, %v853
        %v866 = vadd.f32 %v779, %v860
        %867 = vst [vmem:[%s489] sm:$0xff] %v864
        %868 = vst [vmem:[%s489 + $0x8] sm:$0xff] %v865
        %869 = vst [vmem:[%s489 + $0x10] sm:$0x3] %v866
        %s870 = sand.u32 %s201, 1
        %s871 = scalar_lea.sflag [#allocation4], %s870
        %s872 = sand.u32 %s201, 1
        %s873 = smul.addr %s872, 18
        %s874 = scalar_lea.vmem [#allocation13], %s873
        %s875 = sand.u32 %s227, 1
        %s876 = scalar_lea.sflag [#allocation15], %s875
        %s877 = sand.u32 %s227, 1
        %s878 = smul.addr %s877, 18
        %s879 = scalar_lea.vmem [#allocation14], %s878
        // Predicated region
        $region69: #{tpu_custom_call.1} parent=43 // pred_check
          %p880 = pneg %p211
        $region70: #{tpu_custom_call.1} parent=43 // pred_check_branch
          %882 = sbr.rel (%p880) target = $region72
        $region71: #{tpu_custom_call.1} parent=43 // pred_region
          %s883 = smul.u32 9, %s37
          %s885 = ssub.s32 288, 288
          %886 = vsyncadd %s871, %s885
          %s887 = smul.addr %s883, 32
          %s888 = scalar_lea.hbm %s6, %s887
          %s890 = sshll.u32 %s874, 4
          %s891 = int_to_ptr.vmem [resolvable:$true] %s890
          %893 = dma.vmem_to_hbm [thread:$0]  %s891, 288, %s888, %s871
        $region72: #{tpu_custom_call.1} parent=43 // pred_fallthru
          _
        // Predicated region
        $region73: #{tpu_custom_call.1} parent=43 // pred_check
          %p894 = pneg %p237
        $region74: #{tpu_custom_call.1} parent=43 // pred_check_branch
          %896 = sbr.rel (%p894) target = $region76
        $region75: #{tpu_custom_call.1} parent=43 // pred_region
          %s897 = smul.u32 9, %s37
          %s899 = ssub.s32 288, 288
          %900 = vsyncadd %s876, %s899
          %s901 = smul.addr %s897, 32
          %s902 = scalar_lea.hbm %s7, %s901
          %s904 = sshll.u32 %s879, 4
          %s905 = int_to_ptr.vmem [resolvable:$true] %s904
          %907 = dma.vmem_to_hbm [thread:$0]  %s905, 288, %s902, %s876
        $region76: #{tpu_custom_call.1} parent=43 // pred_fallthru
          _
      $region44: #{tpu_custom_call.1} parent=5 // pred_fallthru
        _
      %p908 = scmp.le.s32.totalorder 2, %s32
      // Predicated region
      $region77: #{tpu_custom_call.1} parent=5 // pred_check
        %p909 = pneg %p908
      $region78: #{tpu_custom_call.1} parent=5 // pred_check_branch
        %911 = sbr.rel (%p909) target = $region80
      $region79: #{tpu_custom_call.1} parent=5 // pred_region
        %s912 = ssub.s32 %s32, 2
        // Predicated region
        $region81: #{tpu_custom_call.1} parent=79 // pred_check
          %p913 = pneg %p217
        $region82: #{tpu_custom_call.1} parent=79 // pred_check_branch
          %915 = sbr.rel (%p913) target = $region84
        $region83: #{tpu_custom_call.1} parent=79 // pred_region
          %s916 = sand.u32 %s202, 1
          %s917 = scalar_lea.sflag [#allocation4], %s916
          %s918 = sand.u32 %s202, 1
          %s919 = smul.addr %s918, 18
          %s920 = scalar_lea.vmem [#allocation13], %s919
          %921 = dma.done %s917, 288
        $region84: #{tpu_custom_call.1} parent=79 // pred_fallthru
          _
        // Predicated region
        $region85: #{tpu_custom_call.1} parent=79 // pred_check
          %p922 = pneg %p243
        $region86: #{tpu_custom_call.1} parent=79 // pred_check_branch
          %924 = sbr.rel (%p922) target = $region88
        $region87: #{tpu_custom_call.1} parent=79 // pred_region
          %s925 = sand.u32 %s228, 1
          %s926 = scalar_lea.sflag [#allocation15], %s925
          %s927 = sand.u32 %s228, 1
          %s928 = smul.addr %s927, 18
          %s929 = scalar_lea.vmem [#allocation14], %s928
          %930 = dma.done %s926, 288
        $region88: #{tpu_custom_call.1} parent=79 // pred_fallthru
          _
      $region80: #{tpu_custom_call.1} parent=5 // pred_fallthru
        _
    $region6: #{tpu_custom_call.1} parent=1 // loop_footer
      %s36 = sadd.s32 1, %s32
    $region7: #{tpu_custom_call.1} parent=1 // loop_footer_branch
      %31 = sbr.rel target = $region3
    $region8: #{tpu_custom_call.1} parent=1 // loop_exit
      _
    %931 = vsyncpa [#allocation3], 1
    %s932 = scalar_lea.sflag [#allocation3], 1
    %933 = vsyncpa %s932, 1
    %934 = vsyncpa [#allocation6], 1
    %s935 = scalar_lea.sflag [#allocation6], 1
    %936 = vsyncpa %s935, 1
    %937 = vsyncpa [#allocation9], 1
    %s938 = scalar_lea.sflag [#allocation9], 1
    %939 = vsyncpa %s938, 1
    %940 = vsyncpa [#allocation12], 1
    %s941 = scalar_lea.sflag [#allocation12], 1
    %942 = vsyncpa %s941, 1
    %943 = vsyncpa [#allocation4], 1
    %s944 = scalar_lea.sflag [#allocation4], 1
    %945 = vsyncpa %s944, 1
    %946 = vsyncpa [#allocation15], 1
    %s947 = scalar_lea.sflag [#allocation15], 1
    %948 = vsyncpa %s947, 1

</llo_original>
